<compile_context>
chip_gen: v7x
topology: tpu7x:2x2x1
jax: 0.10.0
libtpu: 0.0.40
codegen_flags: <defaults>
</compile_context>

<pallas_src>
import jax
import jax.numpy as jnp
from jax import lax
from jax.experimental import pallas as pl
from jax.experimental.pallas import tpu as pltpu


# ----------------------------------------------------------------------------
# Kernel: fused max-pool -> fc1 -> relu -> fc2 -> sigmoid
# ----------------------------------------------------------------------------
def _channel_attention_kernel(x_ref, w1_ref, w2_ref, o_ref, m_ref):
    # x_ref : (b_tile, C, hw_tile)  spatial tile (H*W on lanes), native dtype
    # w1_ref: (C, Ch)   fc1 weight, transposed (pooled @ w1), f32, resident
    # w2_ref: (Ch, C)   fc2 weight, transposed (z @ w2),     f32, resident
    # o_ref : (b_tile, 1, C)        sigmoid(fc2(relu(fc1(maxpool(x)))))
    # m_ref : (b_tile, C, 128)      running-max accumulator (VMEM scratch, x dtype)
    s = pl.program_id(1)                       # spatial (reduction) grid axis

    @pl.when(s == 0)
    def _init():
        m_ref[...] = jnp.full(m_ref.shape, -jnp.inf, m_ref.dtype)

    # Fold this spatial tile into the running max with elementwise (VALU) maxima
    # over 128-lane chunks; the single cross-lane (XLU) reduce happens at finalize.
    n_chunks = x_ref.shape[-1] // 128
    m = m_ref[...]
    if n_chunks <= 32:
        for c in range(n_chunks):              # static unroll, small chunk counts
            m = jnp.maximum(m, x_ref[:, :, c * 128:(c + 1) * 128])
    else:
        def body(c, acc):
            off = pl.multiple_of(c * 128, 128)
            return jnp.maximum(acc, x_ref[:, :, pl.ds(off, 128)])
        m = lax.fori_loop(0, n_chunks, body, m, unroll=4)
    m_ref[...] = m

    @pl.when(s == pl.num_programs(1) - 1)
    def _finalize():
        # AdaptiveMaxPool2d(1): one cross-lane reduce, upcast pooled vector to f32.
        pooled = jnp.max(m_ref[...], axis=-1).astype(jnp.float32)        # (b, C)
        z = jnp.dot(pooled, w1_ref[...], preferred_element_type=jnp.float32)
        z = jnp.maximum(z, 0.0)                                          # ReLU
        o = jnp.dot(z, w2_ref[...], preferred_element_type=jnp.float32)  # (b, C)
        o_ref[...] = jax.nn.sigmoid(o)[:, None, :].astype(o_ref.dtype)


# ----------------------------------------------------------------------------
# Spatial-tile planner: lane-aligned tile sized from a per-buffer VMEM budget.
# ----------------------------------------------------------------------------
def _plan_spatial(hw, col_bytes, budget_bytes):
    """Return (hw_tile, hw_padded).

    hw_tile  : multiple of 128, sized so one x block (col_bytes * hw_tile) stays
               within budget_bytes (the block is double-buffered by the pipeline).
    hw_padded: spatial extent after -inf padding; always divisible by hw_tile.
    """
    max_lanes = (budget_bytes // max(col_bytes, 1)) // 128 * 128
    max_lanes = max(max_lanes, 128)
    hw128 = -(-hw // 128) * 128                      # pad to lane multiple
    if hw128 <= max_lanes:
        return hw128, hw128                          # whole (padded) extent, 1 tile
    # Largest 128-multiple divisor of hw128 not exceeding the budget.
    tile = 128
    t = max_lanes
    while t >= 128:
        if hw128 % t == 0:
            tile = t
            break
        t -= 128
    # If only a tiny divisor exists (e.g. hw128/128 prime), pad further so a large
    # tile divides: waste <= one tile of -inf columns, amortized for large HW.
    if tile < min(1024, max_lanes):
        tile = min(max_lanes, 4096)
        tile -= tile % 128
        hw128 = -(-hw // tile) * tile
    return tile, hw128


# ----------------------------------------------------------------------------
# Wrapper
# ----------------------------------------------------------------------------
def channel_attention(x, fc1_w, fc2_w, *, vmem_budget_bytes=8 << 20):
    """ChannelAttention forward.

    x:     (B, C, H, W)  NCHW, any float dtype (streamed in native dtype)
    fc1_w: (C // 16, C, 1, 1)  Conv2d 1x1, bias=False
    fc2_w: (C, C // 16, 1, 1)  Conv2d 1x1, bias=False
    returns (B, C, 1, 1) in x.dtype
    """
    B, C, H, W = x.shape
    Ch = fc1_w.shape[0]
    HW = H * W
    dtype = x.dtype
    itemsize = jnp.dtype(dtype).itemsize

    # 1x1-conv weights as lane-dense (in, out) matrices for `pooled @ W`.
    w1t = fc1_w.reshape(Ch, C).T.astype(jnp.float32)   # (C, Ch)
    w2t = fc2_w.reshape(C, Ch).T.astype(jnp.float32)   # (Ch, C)

    # Leading "parallel" batch-block axis: >=2 blocks when possible so v7x's second
    # TensorCore shares the streaming; neutral (extra loop level) on 1-TC chips.
    if B == 1:
        b_tile = 1
    elif B % 2 == 0:
        b_tile = B // 2
    else:
        b_tile = 1
    n_b = B // b_tile

    # Spatial tile from the VMEM budget (x block is double-buffered).
    col_bytes = b_tile * C * itemsize
    hw_tile, hw_padded = _plan_spatial(HW, col_bytes, vmem_budget_bytes)
    n_s = hw_padded // hw_tile

    # Free reshape; stream x in its native dtype (no fp32 materialization in HBM).
    x3 = x.reshape(B, C, HW)
    if hw_padded != HW:
        # -inf padding is the identity for max-pool and keeps lane-aligned tiles.
        x3 = jnp.pad(x3, ((0, 0), (0, 0), (0, hw_padded - HW)),
                     constant_values=-jnp.inf)

    grid = (n_b, n_s)

    # VMEM footprint estimate (x double-buffered + weights + scratch + output).
    x_block_bytes = b_tile * C * hw_tile * itemsize
    aux_bytes = 4 * (w1t.size + w2t.size) + itemsize * b_tile * C * 128 \
        + itemsize * b_tile * C
    est_vmem = 2 * x_block_bytes + 2 * aux_bytes
    vmem_limit = None
    if est_vmem > (12 << 20):
        # Raise the scoped limit (v5e default is 16 MiB) but stay well under the
        # 64 MiB physical VMEM of v7x.
        vmem_limit = int(min(est_vmem + (8 << 20), 48 << 20))

    flops = 4 * B * C * Ch + B * C * hw_padded       # two tiny matmuls + max-reduce
    bytes_accessed = itemsize * B * C * hw_padded \
        + 4 * (w1t.size + w2t.size) + itemsize * B * C

    out = pl.pallas_call(
        _channel_attention_kernel,
        out_shape=jax.ShapeDtypeStruct((B, 1, C), dtype),
        grid=grid,
        in_specs=[
            pl.BlockSpec((b_tile, C, hw_tile), lambda b, s: (b, 0, s)),  # stream x
            pl.BlockSpec((C, Ch), lambda b, s: (0, 0)),                  # fc1 (resident)
            pl.BlockSpec((Ch, C), lambda b, s: (0, 0)),                  # fc2 (resident)
        ],
        out_specs=pl.BlockSpec((b_tile, 1, C), lambda b, s: (b, 0, 0)),
        scratch_shapes=[pltpu.VMEM((b_tile, C, 128), dtype)],            # running max
        compiler_params=pltpu.CompilerParams(
            dimension_semantics=("parallel", "arbitrary"),
            vmem_limit_bytes=vmem_limit),
        cost_estimate=pl.CostEstimate(
            flops=flops, transcendentals=B * C, bytes_accessed=bytes_accessed),
    )(x3, w1t, w2t)

    return out.reshape(B, C, 1, 1)


# ----------------------------------------------------------------------------
if __name__ == "__main__":
    key = jax.random.PRNGKey(0)
    kx, k1, k2 = jax.random.split(key, 3)

    # in_planes=64 (fc1 divides channels by the hard-coded 16 -> hidden=4)
    B, C, H, W = 2, 64, 32, 32
    Ch = C // 16

    x = jax.random.normal(kx, (B, C, H, W), jnp.float32)
    fc1_w = jax.random.normal(k1, (Ch, C, 1, 1), jnp.float32) * 0.1
    fc2_w = jax.random.normal(k2, (C, Ch, 1, 1), jnp.float32) * 0.1

    fwd = jax.jit(channel_attention)
    out = fwd(x, fc1_w, fc2_w)
    jax.block_until_ready(out)

    # Pure-JAX reference of the PyTorch forward.
    m = jnp.max(x, axis=(2, 3))                                  # AdaptiveMaxPool2d(1)
    z = jnp.maximum(m @ fc1_w.reshape(Ch, C).T, 0.0)             # fc1 + ReLU
    ref = jax.nn.sigmoid(z @ fc2_w.reshape(C, Ch).T).reshape(B, C, 1, 1)

    assert out.shape == (B, C, 1, 1)
    assert bool(jnp.all(jnp.isfinite(out)))
    assert bool(jnp.allclose(out, ref, atol=1e-5, rtol=1e-5))
    print("KERNEL_OK")
</pallas_src>

<mosaic_0001>
module attributes {stable_mosaic.version = 11 : i64} {
  func.func @_channel_attention_kernel(%arg0: i32, %arg1: i32, %arg2: memref<1x64x1024xf32, #tpu.memory_space<vmem>>, %arg3: memref<64x4xf32, #tpu.memory_space<vmem>>, %arg4: memref<4x64xf32, #tpu.memory_space<vmem>>, %arg5: memref<1x1x64xf32, #tpu.memory_space<vmem>>, %arg6: memref<1x64x128xf32, #tpu.memory_space<vmem>>) attributes {dimension_semantics = [#tpu.dimension_semantics<parallel>, #tpu.dimension_semantics<arbitrary>], iteration_bounds = array<i64: 2, 1>, scalar_prefetch = 0 : i64, scratch_operands = 1 : i64, tpu.core_type = #tpu.core_type<tc>, window_params = [{transform_indices = @transform_0, window_bounds = array<i64: 1, 64, 1024>}, {pipeline_mode = #tpu.pipeline_mode<synchronous>, transform_indices = @transform_1, window_bounds = array<i64: 64, 4>}, {pipeline_mode = #tpu.pipeline_mode<synchronous>, transform_indices = @transform_2, window_bounds = array<i64: 4, 64>}, {transform_indices = @transform_3, window_bounds = array<i64: 1, 1, 64>}]} {
    %c0_i32 = arith.constant 0 : i32
    %0 = arith.cmpi eq, %arg1, %c0_i32 : i32
    %1 = arith.extui %0 : i1 to i32
    %c0_i32_0 = arith.constant 0 : i32
    %2 = arith.cmpi ne, %1, %c0_i32_0 : i32
    scf.if %2 {
      %cst = arith.constant 0xFF800000 : f32
      %24 = vector.broadcast %cst : f32 to vector<1x64x128xf32>
      %c0_25 = arith.constant 0 : index
      %c0_26 = arith.constant 0 : index
      %c0_27 = arith.constant 0 : index
      %25 = vector.load %arg6[%c0_25, %c0_26, %c0_27] : memref<1x64x128xf32, #tpu.memory_space<vmem>>, vector<1x64x128xf32>
      tpu.vector_store %arg6[%c0_25, %c0_26, %c0_27], %24 {strides = array<i32>} : memref<1x64x128xf32, #tpu.memory_space<vmem>>, vector<1x64x128xf32>,
    } else {
    }
    %c0 = arith.constant 0 : index
    %c0_1 = arith.constant 0 : index
    %c0_2 = arith.constant 0 : index
    %3 = vector.load %arg6[%c0, %c0_1, %c0_2] : memref<1x64x128xf32, #tpu.memory_space<vmem>>, vector<1x64x128xf32>
    %c0_3 = arith.constant 0 : index
    %c0_4 = arith.constant 0 : index
    %c0_5 = arith.constant 0 : index
    %4 = vector.load %arg2[%c0_3, %c0_4, %c0_5] : memref<1x64x1024xf32, #tpu.memory_space<vmem>>, vector<1x64x128xf32>
    %5 = arith.maximumf %3, %4 : vector<1x64x128xf32>
    %c0_6 = arith.constant 0 : index
    %c0_7 = arith.constant 0 : index
    %c128 = arith.constant 128 : index
    %6 = vector.load %arg2[%c0_6, %c0_7, %c128] : memref<1x64x1024xf32, #tpu.memory_space<vmem>>, vector<1x64x128xf32>
    %7 = arith.maximumf %5, %6 : vector<1x64x128xf32>
    %c0_8 = arith.constant 0 : index
    %c0_9 = arith.constant 0 : index
    %c256 = arith.constant 256 : index
    %8 = vector.load %arg2[%c0_8, %c0_9, %c256] : memref<1x64x1024xf32, #tpu.memory_space<vmem>>, vector<1x64x128xf32>
    %9 = arith.maximumf %7, %8 : vector<1x64x128xf32>
    %c0_10 = arith.constant 0 : index
    %c0_11 = arith.constant 0 : index
    %c384 = arith.constant 384 : index
    %10 = vector.load %arg2[%c0_10, %c0_11, %c384] : memref<1x64x1024xf32, #tpu.memory_space<vmem>>, vector<1x64x128xf32>
    %11 = arith.maximumf %9, %10 : vector<1x64x128xf32>
    %c0_12 = arith.constant 0 : index
    %c0_13 = arith.constant 0 : index
    %c512 = arith.constant 512 : index
    %12 = vector.load %arg2[%c0_12, %c0_13, %c512] : memref<1x64x1024xf32, #tpu.memory_space<vmem>>, vector<1x64x128xf32>
    %13 = arith.maximumf %11, %12 : vector<1x64x128xf32>
    %c0_14 = arith.constant 0 : index
    %c0_15 = arith.constant 0 : index
    %c640 = arith.constant 640 : index
    %14 = vector.load %arg2[%c0_14, %c0_15, %c640] : memref<1x64x1024xf32, #tpu.memory_space<vmem>>, vector<1x64x128xf32>
    %15 = arith.maximumf %13, %14 : vector<1x64x128xf32>
    %c0_16 = arith.constant 0 : index
    %c0_17 = arith.constant 0 : index
    %c768 = arith.constant 768 : index
    %16 = vector.load %arg2[%c0_16, %c0_17, %c768] : memref<1x64x1024xf32, #tpu.memory_space<vmem>>, vector<1x64x128xf32>
    %17 = arith.maximumf %15, %16 : vector<1x64x128xf32>
    %c0_18 = arith.constant 0 : index
    %c0_19 = arith.constant 0 : index
    %c896 = arith.constant 896 : index
    %18 = vector.load %arg2[%c0_18, %c0_19, %c896] : memref<1x64x1024xf32, #tpu.memory_space<vmem>>, vector<1x64x128xf32>
    %19 = arith.maximumf %17, %18 : vector<1x64x128xf32>
    %c0_20 = arith.constant 0 : index
    %c0_21 = arith.constant 0 : index
    %c0_22 = arith.constant 0 : index
    %20 = vector.load %arg6[%c0_20, %c0_21, %c0_22] : memref<1x64x128xf32, #tpu.memory_space<vmem>>, vector<1x64x128xf32>
    tpu.vector_store %arg6[%c0_20, %c0_21, %c0_22], %19 {strides = array<i32>} : memref<1x64x128xf32, #tpu.memory_space<vmem>>, vector<1x64x128xf32>,
    %c0_i32_23 = arith.constant 0 : i32
    %21 = arith.cmpi eq, %arg1, %c0_i32_23 : i32
    %22 = arith.extui %21 : i1 to i32
    %c0_i32_24 = arith.constant 0 : i32
    %23 = arith.cmpi ne, %22, %c0_i32_24 : i32
    scf.if %23 {
      %c0_25 = arith.constant 0 : index
      %c0_26 = arith.constant 0 : index
      %c0_27 = arith.constant 0 : index
      %24 = vector.load %arg6[%c0_25, %c0_26, %c0_27] : memref<1x64x128xf32, #tpu.memory_space<vmem>>, vector<1x64x128xf32>
      %cst = arith.constant dense<0xFF800000> : vector<1x64xf32>
      %25 = vector.multi_reduction <maximumf>, %24, %cst [2] : vector<1x64x128xf32> to vector<1x64xf32>
      %c0_28 = arith.constant 0 : index
      %c0_29 = arith.constant 0 : index
      %26 = vector.load %arg3[%c0_28, %c0_29] : memref<64x4xf32, #tpu.memory_space<vmem>>, vector<64x4xf32>
      %cst_30 = arith.constant dense<0.000000e+00> : vector<1x4xf32>
      %27 = tpu.matmul %25, %26, %cst_30 {dimension_numbers = #tpu.dot_dimension_numbers<[1], [0], [0], [1], [0, 0, 1, 1], [], []>} : vector<1x64xf32>, vector<64x4xf32>, vector<1x4xf32> -> vector<1x4xf32>
      %cst_31 = arith.constant 0.000000e+00 : f32
      %28 = vector.broadcast %cst_31 : f32 to vector<1x4xf32>
      %29 = arith.maximumf %27, %28 : vector<1x4xf32>
      %c0_32 = arith.constant 0 : index
      %c0_33 = arith.constant 0 : index
      %30 = vector.load %arg4[%c0_32, %c0_33] : memref<4x64xf32, #tpu.memory_space<vmem>>, vector<4x64xf32>
      %cst_34 = arith.constant dense<0.000000e+00> : vector<1x64xf32>
      %31 = tpu.matmul %29, %30, %cst_34 {dimension_numbers = #tpu.dot_dimension_numbers<[1], [0], [0], [1], [0, 0, 1, 1], [], []>} : vector<1x4xf32>, vector<4x64xf32>, vector<1x64xf32> -> vector<1x64xf32>
      %32 = arith.negf %31 : vector<1x64xf32>
      %33 = math.exp %32 : vector<1x64xf32>
      %cst_35 = arith.constant 1.000000e+00 : f32
      %34 = vector.broadcast %cst_35 : f32 to vector<1x64xf32>
      %35 = arith.addf %34, %33 : vector<1x64xf32>
      %36 = arith.divf %34, %35 : vector<1x64xf32>
      %37 = vector.shape_cast %36 : vector<1x64xf32> to vector<1x1x64xf32>
      %c0_36 = arith.constant 0 : index
      %c0_37 = arith.constant 0 : index
      %c0_38 = arith.constant 0 : index
      %38 = vector.load %arg5[%c0_36, %c0_37, %c0_38] : memref<1x1x64xf32, #tpu.memory_space<vmem>>, vector<1x1x64xf32>
      tpu.vector_store %arg5[%c0_36, %c0_37, %c0_38], %37 {strides = array<i32>} : memref<1x1x64xf32, #tpu.memory_space<vmem>>, vector<1x1x64xf32>,
    } else {
    }
    return
  }
  func.func @transform_0(%arg0: i32, %arg1: i32) -> (i32, i32, i32) {
    %c0_i32 = arith.constant 0 : i32
    %c0_i32_0 = arith.constant 0 : i32
    return %arg0, %c0_i32, %arg1 : i32, i32, i32
  }
  func.func @transform_1(%arg0: i32, %arg1: i32) -> (i32, i32) {
    %c0_i32 = arith.constant 0 : i32
    %c0_i32_0 = arith.constant 0 : i32
    %c0_i32_1 = arith.constant 0 : i32
    return %c0_i32, %c0_i32_0 : i32, i32
  }
  func.func @transform_2(%arg0: i32, %arg1: i32) -> (i32, i32) {
    %c0_i32 = arith.constant 0 : i32
    %c0_i32_0 = arith.constant 0 : i32
    %c0_i32_1 = arith.constant 0 : i32
    return %c0_i32, %c0_i32_0 : i32, i32
  }
  func.func @transform_3(%arg0: i32, %arg1: i32) -> (i32, i32, i32) {
    %c0_i32 = arith.constant 0 : i32
    %c0_i32_0 = arith.constant 0 : i32
    %c0_i32_1 = arith.constant 0 : i32
    return %arg0, %c0_i32, %c0_i32_0 : i32, i32, i32
  }
}

</mosaic_0001>

<llo_original>
// kernel: channel_attention.1
$region0: #{channel_attention.1}
  #allocation0 [shape = 'u32[]', space=smem, size = 0x4, offset = 0x4, fixed_abs, tag = 'smem constant byte address 0x4 - core index']
  #allocation1 [shape = 'u32[144,128]{1,0:T(1,128)}', space=vmem, size = 0x12000, scoped, tag = 'internal scratch']
  #allocation2 [shape = 'f32[1,64,128]{2,1,0:T(8,128)}', space=vmem, size = 0x8000, scoped, tag = 'scratch operand']
  %s0 = inlined_call_operand.vmem [shape: f32[2,64,1024], index: 0, kind: input, shape index: {}]
  %s1 = inlined_call_operand.vmem [shape: f32[64,4], index: 1, kind: input, shape index: {}]
  %s2 = inlined_call_operand.vmem [shape: f32[4,64], index: 2, kind: input, shape index: {}]
  %s3 = inlined_call_operand.hbm [shape: f32[2,1,64], index: 3, kind: output, shape index: {}]
  %s4 = sld [smem:[#allocation0]]
  $region53: #{channel_attention.1} parent=0
    _
  %s6 = ssub.s32 1, %s4
  %s7 = scalar_select 0, %s6, %s4
  $region1: #{channel_attention.1} parent=0
    #allocation3 [shape = 'u8[1024]{0}', space=vmem, size = 0x400, scoped, tag = 'output window, operand 0']
    #allocation4 [shape = 's32[2]{0}', space=sflag, size = 0x8, scoped, tag = 'scoped memory for channel_attention.1']
    %8 = vsyncpa [#allocation4], 0
    %s9 = scalar_lea.sflag [#allocation4], 1
    %10 = vsyncpa %s9, 0
    loop: start=0, step=1, limit=4
    $region2: #{channel_attention.1} parent=1 // loop_pre_header
      _
    $region3: #{channel_attention.1} parent=1 // loop_header
      %s12 = sphi 0, %s16
      %p13 = scmp.ge.s32.totalorder %s12, 4
      %s19 = sphi 0, %s31
      %s20 = sphi 0, %s27
      %s21 = sphi 0, %s19
      %s22 = sphi 0, %s20
      %s23 = sphi 0, %s21
      %s24 = sphi 0, %s22
      %s36 = sphi 0, %s38
      %s39 = sphi 0, %s36
      %s40 = sphi 0, %s39
      %s56 = sphi 0, %s40
      %s60 = sphi 0, %s60
      %s62 = sphi 0, %s60
      %s63 = sphi 0, %s62
      %s77 = sphi 0, %s63
      %s81 = sphi 0, %s81
      %s83 = sphi 0, %s81
      %s84 = sphi 0, %s83
      %s98 = sphi 0, %s84
      %s104 = sphi 0, %s106
      %s107 = sphi 0, %s104
      %s108 = sphi 0, %s107
      %s124 = sphi 0, %s108
    $region4: #{channel_attention.1} parent=1 // loop_header_branch
      %15 = sbr.rel (%p13) target = $region8
    $region5: #{channel_attention.1} parent=1 // loop_body
      %s17 = ssub.s32 %s12, 1
      %s18 = ssub.s32 %s12, 2
      %s25 = sadd.s32 1, %s20
      %p26 = scmp.ge.s32.totalorder %s25, 1
      %s27 = scalar_select %p26, 0, %s25
      %s28 = sadd.s32 1, %s19
      %s29 = scalar_select %p26, %s28, %s19
      %p30 = scmp.ge.s32.totalorder %s29, 2
      %s31 = scalar_select %p30, 0, %s29
      %s32 = ssub.s32 %s19, %s31
      %s33 = ssub.s32 %s20, %s27
      %s34 = sor.u32 %s32, %s33
      %p35 = scmp.eq.s32.totalorder %s34, 0
      %s37 = sadd.s32 %s36, 1
      %s38 = scalar_select %p35, %s36, %s37
      %p41 = pneg %p35
      %p42 = scmp.eq.s32.totalorder %s12, 1
      %p43 = por %p41, %p42
      %p44 = scmp.ne.s32.totalorder %s36, %s39
      %p45 = scmp.eq.s32.totalorder %s12, 0
      %p46 = por %p44, %p45
      %p47 = scmp.ne.s32.totalorder %s36, %s39
      %p48 = scmp.eq.s32.totalorder %s17, 1
      %p49 = por %p47, %p48
      %p50 = scmp.ne.s32.totalorder %s39, %s40
      %p51 = scmp.eq.s32.totalorder %s17, 0
      %p52 = por %p50, %p51
      %p53 = scmp.ne.s32.totalorder %s39, %s40
      %p54 = scmp.eq.s32.totalorder %s18, 1
      %p55 = por %p53, %p54
      %p57 = scmp.ne.s32.totalorder %s40, %s56
      %p58 = scmp.eq.s32.totalorder %s18, 0
      %p59 = por %p57, %p58
      %s61 = sadd.s32 %s60, 1
      %p64 = scmp.eq.s32.totalorder %s12, 1
      %p65 = scmp.ne.s32.totalorder %s60, %s62
      %p66 = scmp.eq.s32.totalorder %s12, 0
      %p67 = por %p65, %p66
      %p68 = scmp.ne.s32.totalorder %s60, %s62
      %p69 = scmp.eq.s32.totalorder %s17, 1
      %p70 = por %p68, %p69
      %p71 = scmp.ne.s32.totalorder %s62, %s63
      %p72 = scmp.eq.s32.totalorder %s17, 0
      %p73 = por %p71, %p72
      %p74 = scmp.ne.s32.totalorder %s62, %s63
      %p75 = scmp.eq.s32.totalorder %s18, 1
      %p76 = por %p74, %p75
      %p78 = scmp.ne.s32.totalorder %s63, %s77
      %p79 = scmp.eq.s32.totalorder %s18, 0
      %p80 = por %p78, %p79
      %s82 = sadd.s32 %s81, 1
      %p85 = scmp.eq.s32.totalorder %s12, 1
      %p86 = scmp.ne.s32.totalorder %s81, %s83
      %p87 = scmp.eq.s32.totalorder %s12, 0
      %p88 = por %p86, %p87
      %p89 = scmp.ne.s32.totalorder %s81, %s83
      %p90 = scmp.eq.s32.totalorder %s17, 1
      %p91 = por %p89, %p90
      %p92 = scmp.ne.s32.totalorder %s83, %s84
      %p93 = scmp.eq.s32.totalorder %s17, 0
      %p94 = por %p92, %p93
      %p95 = scmp.ne.s32.totalorder %s83, %s84
      %p96 = scmp.eq.s32.totalorder %s18, 1
      %p97 = por %p95, %p96
      %p99 = scmp.ne.s32.totalorder %s84, %s98
      %p100 = scmp.eq.s32.totalorder %s18, 0
      %p101 = por %p99, %p100
      %s102 = ssub.s32 %s19, %s31
      %p103 = scmp.eq.s32.totalorder %s102, 0
      %s105 = sadd.s32 %s104, 1
      %s106 = scalar_select %p103, %s104, %s105
      %p109 = pneg %p103
      %p110 = scmp.eq.s32.totalorder %s12, 1
      %p111 = por %p109, %p110
      %p112 = scmp.ne.s32.totalorder %s104, %s107
      %p113 = scmp.eq.s32.totalorder %s12, 0
      %p114 = por %p112, %p113
      %p115 = scmp.ne.s32.totalorder %s104, %s107
      %p116 = scmp.eq.s32.totalorder %s17, 1
      %p117 = por %p115, %p116
      %p118 = scmp.ne.s32.totalorder %s107, %s108
      %p119 = scmp.eq.s32.totalorder %s17, 0
      %p120 = por %p118, %p119
      %p121 = scmp.ne.s32.totalorder %s107, %s108
      %p122 = scmp.eq.s32.totalorder %s18, 1
      %p123 = por %p121, %p122
      %p125 = scmp.ne.s32.totalorder %s108, %s124
      %p126 = scmp.eq.s32.totalorder %s18, 0
      %p127 = por %p125, %p126
      %p128 = scmp.le.s32.totalorder 1, %s12
      %p129 = scmp.lt.s32.totalorder %s12, 3
      %p130 = pnand %p128, %p129
      %p131 = pneg %p130
      // Predicated region
      $region9: #{channel_attention.1} parent=5 // pred_check
        _
      $region10: #{channel_attention.1} parent=5 // pred_check_branch
        %133 = sbr.rel (%p130) target = $region12
      $region11: #{channel_attention.1} parent=5 // pred_region
        %s134 = ssub.s32 %s12, 1
        // Predicated region
        $region13: #{channel_attention.1} parent=11 // pred_check
          %p135 = pneg %p73
        $region14: #{channel_attention.1} parent=11 // pred_check_branch
          %137 = sbr.rel (%p135) target = $region16
        $region15: #{channel_attention.1} parent=11 // pred_region
          _
        $region16: #{channel_attention.1} parent=11 // pred_fallthru
          _
        // Predicated region
        $region17: #{channel_attention.1} parent=11 // pred_check
          %p138 = pneg %p94
        $region18: #{channel_attention.1} parent=11 // pred_check_branch
          %140 = sbr.rel (%p138) target = $region20
        $region19: #{channel_attention.1} parent=11 // pred_region
          _
        $region20: #{channel_attention.1} parent=11 // pred_fallthru
          _
      $region12: #{channel_attention.1} parent=5 // pred_fallthru
        _
      %p141 = scmp.lt.s32.totalorder %s12, 2
      // Predicated region
      $region21: #{channel_attention.1} parent=5 // pred_check
        %p142 = pneg %p141
      $region22: #{channel_attention.1} parent=5 // pred_check_branch
        %144 = sbr.rel (%p142) target = $region24
      $region23: #{channel_attention.1} parent=5 // pred_region
        // Predicated region
        $region25: #{channel_attention.1} parent=23 // pred_check
          %p145 = pneg %p46
        $region26: #{channel_attention.1} parent=23 // pred_check_branch
          %147 = sbr.rel (%p145) target = $region28
        $region27: #{channel_attention.1} parent=23 // pred_region
          %s148 = smul.u32 8, %s20
          %p149 = scmp.lt.s32.totalorder %s19, 1
          %s150 = scalar_select %p149, %s19, 1
          %p151 = scmp.lt.s32.totalorder %s148, 7
          %s152 = scalar_select %p151, %s148, 7
          %s153 = smul.addr %s150, 64
          %s154 = sadd.s32 %s152, %s153
          %s155 = smul.addr %s154, 8
          %s156 = scalar_lea.vmem %s0, %s155
          %s157 = smul.u32 8, %s20
        $region28: #{channel_attention.1} parent=23 // pred_fallthru
          _
      $region24: #{channel_attention.1} parent=5 // pred_fallthru
        _
      %p158 = scmp.le.s32.totalorder 1, %s12
      %p159 = scmp.lt.s32.totalorder %s12, 3
      %p160 = pnand %p158, %p159
      %p161 = pneg %p160
      // Predicated region
      $region29: #{channel_attention.1} parent=5 // pred_check
        _
      $region30: #{channel_attention.1} parent=5 // pred_check_branch
        %163 = sbr.rel (%p160) target = $region32
      $region31: #{channel_attention.1} parent=5 // pred_region
        %s164 = ssub.s32 %s12, 1
        %s165 = smul.u32 8, %s22
        %p166 = scmp.lt.s32.totalorder %s21, 1
        %s167 = scalar_select %p166, %s21, 1
        %p168 = scmp.lt.s32.totalorder %s165, 7
        %s169 = scalar_select %p168, %s165, 7
        %s170 = smul.addr %s167, 64
        %s171 = sadd.s32 %s169, %s170
        %s172 = smul.addr %s171, 8
        %s173 = scalar_lea.vmem %s0, %s172
        %p174 = pneg %p52
        %p175 = pneg %p49
        %p176 = pneg %p73
        %p177 = pneg %p70
        %p178 = pneg %p94
        %p179 = pneg %p91
        %p180 = pneg %p120
        %p181 = pneg %p117
        %s182 = sand.u32 %s107, 1
        %s183 = scalar_lea.sflag [#allocation4], %s182
        %s184 = sand.u32 %s107, 1
        %s185 = scalar_lea.vmem [#allocation3], %s184
        %s186 = smul.u32 8, %s22
        %p187 = scmp.lt.s32.totalorder %s21, 1
        %s188 = scalar_select %p187, %s21, 1
        %p189 = scmp.lt.s32.totalorder %s186, 7
        %s190 = scalar_select %p189, %s186, 7
        %s191 = smul.addr %s188, 64
        %s192 = sadd.s32 %s190, %s191
        %s193 = smul.addr %s192, 8
        %s194 = scalar_lea.vmem %s0, %s193
        %s195 = smul.u32 8, %s22
        %p196 = scmp.eq.s32.totalorder %s22, 0
        // Predicated region
        $region33: #{channel_attention.1} parent=31 // pred_check
          %p197 = pneg %p196
        $region34: #{channel_attention.1} parent=31 // pred_check_branch
          %199 = sbr.rel (%p197) target = $region36
        $region35: #{channel_attention.1} parent=31 // pred_region
          %200 = vst [vmem:[#allocation2] sm:$0xff] -inf
          %201 = vst [vmem:[#allocation2 + $0x8] sm:$0xff] -inf
          %202 = vst [vmem:[#allocation2 + $0x10] sm:$0xff] -inf
          %203 = vst [vmem:[#allocation2 + $0x18] sm:$0xff] -inf
          %204 = vst [vmem:[#allocation2 + $0x20] sm:$0xff] -inf
          %205 = vst [vmem:[#allocation2 + $0x28] sm:$0xff] -inf
          %206 = vst [vmem:[#allocation2 + $0x30] sm:$0xff] -inf
          %207 = vst [vmem:[#allocation2 + $0x38] sm:$0xff] -inf
        $region36: #{channel_attention.1} parent=31 // pred_fallthru
          _
        %v208 = vld [vmem:[#allocation2] sm:$0xff]
        %v209 = vld [vmem:[#allocation2 + $0x8] sm:$0xff]
        %v210 = vld [vmem:[#allocation2 + $0x10] sm:$0xff]
        %v211 = vld [vmem:[#allocation2 + $0x18] sm:$0xff]
        %v212 = vld [vmem:[#allocation2 + $0x20] sm:$0xff]
        %v213 = vld [vmem:[#allocation2 + $0x28] sm:$0xff]
        %v214 = vld [vmem:[#allocation2 + $0x30] sm:$0xff]
        %v215 = vld [vmem:[#allocation2 + $0x38] sm:$0xff]
        %v216 = vld [vmem:[%s194] sm:$0xff]
        %v217 = vld [vmem:[%s194 + $0x40] sm:$0xff]
        %v218 = vld [vmem:[%s194 + $0x80] sm:$0xff]
        %v219 = vld [vmem:[%s194 + $0xc0] sm:$0xff]
        %v220 = vld [vmem:[%s194 + $0x100] sm:$0xff]
        %v221 = vld [vmem:[%s194 + $0x140] sm:$0xff]
        %v222 = vld [vmem:[%s194 + $0x180] sm:$0xff]
        %v223 = vld [vmem:[%s194 + $0x1c0] sm:$0xff]
        %v224 = vmax.f32 %v208, %v216
        %v225 = vmax.f32 %v209, %v217
        %v226 = vmax.f32 %v210, %v218
        %v227 = vmax.f32 %v211, %v219
        %v228 = vmax.f32 %v212, %v220
        %v229 = vmax.f32 %v213, %v221
        %v230 = vmax.f32 %v214, %v222
        %v231 = vmax.f32 %v215, %v223
        %v232 = vld [vmem:[%s194 + $0x8] sm:$0xff]
        %v233 = vld [vmem:[%s194 + $0x48] sm:$0xff]
        %v234 = vld [vmem:[%s194 + $0x88] sm:$0xff]
        %v235 = vld [vmem:[%s194 + $0xc8] sm:$0xff]
        %v236 = vld [vmem:[%s194 + $0x108] sm:$0xff]
        %v237 = vld [vmem:[%s194 + $0x148] sm:$0xff]
        %v238 = vld [vmem:[%s194 + $0x188] sm:$0xff]
        %v239 = vld [vmem:[%s194 + $0x1c8] sm:$0xff]
        %v240 = vmax.f32 %v224, %v232
        %v241 = vmax.f32 %v225, %v233
        %v242 = vmax.f32 %v226, %v234
        %v243 = vmax.f32 %v227, %v235
        %v244 = vmax.f32 %v228, %v236
        %v245 = vmax.f32 %v229, %v237
        %v246 = vmax.f32 %v230, %v238
        %v247 = vmax.f32 %v231, %v239
        %v248 = vld [vmem:[%s194 + $0x10] sm:$0xff]
        %v249 = vld [vmem:[%s194 + $0x50] sm:$0xff]
        %v250 = vld [vmem:[%s194 + $0x90] sm:$0xff]
        %v251 = vld [vmem:[%s194 + $0xd0] sm:$0xff]
        %v252 = vld [vmem:[%s194 + $0x110] sm:$0xff]
        %v253 = vld [vmem:[%s194 + $0x150] sm:$0xff]
        %v254 = vld [vmem:[%s194 + $0x190] sm:$0xff]
        %v255 = vld [vmem:[%s194 + $0x1d0] sm:$0xff]
        %v256 = vmax.f32 %v240, %v248
        %v257 = vmax.f32 %v241, %v249
        %v258 = vmax.f32 %v242, %v250
        %v259 = vmax.f32 %v243, %v251
        %v260 = vmax.f32 %v244, %v252
        %v261 = vmax.f32 %v245, %v253
        %v262 = vmax.f32 %v246, %v254
        %v263 = vmax.f32 %v247, %v255
        %v264 = vld [vmem:[%s194 + $0x18] sm:$0xff]
        %v265 = vld [vmem:[%s194 + $0x58] sm:$0xff]
        %v266 = vld [vmem:[%s194 + $0x98] sm:$0xff]
        %v267 = vld [vmem:[%s194 + $0xd8] sm:$0xff]
        %v268 = vld [vmem:[%s194 + $0x118] sm:$0xff]
        %v269 = vld [vmem:[%s194 + $0x158] sm:$0xff]
        %v270 = vld [vmem:[%s194 + $0x198] sm:$0xff]
        %v271 = vld [vmem:[%s194 + $0x1d8] sm:$0xff]
        %v272 = vmax.f32 %v256, %v264
        %v273 = vmax.f32 %v257, %v265
        %v274 = vmax.f32 %v258, %v266
        %v275 = vmax.f32 %v259, %v267
        %v276 = vmax.f32 %v260, %v268
        %v277 = vmax.f32 %v261, %v269
        %v278 = vmax.f32 %v262, %v270
        %v279 = vmax.f32 %v263, %v271
        %v280 = vld [vmem:[%s194 + $0x20] sm:$0xff]
        %v281 = vld [vmem:[%s194 + $0x60] sm:$0xff]
        %v282 = vld [vmem:[%s194 + $0xa0] sm:$0xff]
        %v283 = vld [vmem:[%s194 + $0xe0] sm:$0xff]
        %v284 = vld [vmem:[%s194 + $0x120] sm:$0xff]
        %v285 = vld [vmem:[%s194 + $0x160] sm:$0xff]
        %v286 = vld [vmem:[%s194 + $0x1a0] sm:$0xff]
        %v287 = vld [vmem:[%s194 + $0x1e0] sm:$0xff]
        %v288 = vmax.f32 %v272, %v280
        %v289 = vmax.f32 %v273, %v281
        %v290 = vmax.f32 %v274, %v282
        %v291 = vmax.f32 %v275, %v283
        %v292 = vmax.f32 %v276, %v284
        %v293 = vmax.f32 %v277, %v285
        %v294 = vmax.f32 %v278, %v286
        %v295 = vmax.f32 %v279, %v287
        %v296 = vld [vmem:[%s194 + $0x28] sm:$0xff]
        %v297 = vld [vmem:[%s194 + $0x68] sm:$0xff]
        %v298 = vld [vmem:[%s194 + $0xa8] sm:$0xff]
        %v299 = vld [vmem:[%s194 + $0xe8] sm:$0xff]
        %v300 = vld [vmem:[%s194 + $0x128] sm:$0xff]
        %v301 = vld [vmem:[%s194 + $0x168] sm:$0xff]
        %v302 = vld [vmem:[%s194 + $0x1a8] sm:$0xff]
        %v303 = vld [vmem:[%s194 + $0x1e8] sm:$0xff]
        %v304 = vmax.f32 %v288, %v296
        %v305 = vmax.f32 %v289, %v297
        %v306 = vmax.f32 %v290, %v298
        %v307 = vmax.f32 %v291, %v299
        %v308 = vmax.f32 %v292, %v300
        %v309 = vmax.f32 %v293, %v301
        %v310 = vmax.f32 %v294, %v302
        %v311 = vmax.f32 %v295, %v303
        %v312 = vld [vmem:[%s194 + $0x30] sm:$0xff]
        %v313 = vld [vmem:[%s194 + $0x70] sm:$0xff]
        %v314 = vld [vmem:[%s194 + $0xb0] sm:$0xff]
        %v315 = vld [vmem:[%s194 + $0xf0] sm:$0xff]
        %v316 = vld [vmem:[%s194 + $0x130] sm:$0xff]
        %v317 = vld [vmem:[%s194 + $0x170] sm:$0xff]
        %v318 = vld [vmem:[%s194 + $0x1b0] sm:$0xff]
        %v319 = vld [vmem:[%s194 + $0x1f0] sm:$0xff]
        %v320 = vmax.f32 %v304, %v312
        %v321 = vmax.f32 %v305, %v313
        %v322 = vmax.f32 %v306, %v314
        %v323 = vmax.f32 %v307, %v315
        %v324 = vmax.f32 %v308, %v316
        %v325 = vmax.f32 %v309, %v317
        %v326 = vmax.f32 %v310, %v318
        %v327 = vmax.f32 %v311, %v319
        %v328 = vld [vmem:[%s194 + $0x38] sm:$0xff]
        %v329 = vld [vmem:[%s194 + $0x78] sm:$0xff]
        %v330 = vld [vmem:[%s194 + $0xb8] sm:$0xff]
        %v331 = vld [vmem:[%s194 + $0xf8] sm:$0xff]
        %v332 = vld [vmem:[%s194 + $0x138] sm:$0xff]
        %v333 = vld [vmem:[%s194 + $0x178] sm:$0xff]
        %v334 = vld [vmem:[%s194 + $0x1b8] sm:$0xff]
        %v335 = vld [vmem:[%s194 + $0x1f8] sm:$0xff]
        %v336 = vmax.f32 %v320, %v328
        %v337 = vmax.f32 %v321, %v329
        %v338 = vmax.f32 %v322, %v330
        %v339 = vmax.f32 %v323, %v331
        %v340 = vmax.f32 %v324, %v332
        %v341 = vmax.f32 %v325, %v333
        %v342 = vmax.f32 %v326, %v334
        %v343 = vmax.f32 %v327, %v335
        %344 = vst [vmem:[#allocation2] sm:$0xff] %v336
        %345 = vst [vmem:[#allocation2 + $0x8] sm:$0xff] %v337
        %346 = vst [vmem:[#allocation2 + $0x10] sm:$0xff] %v338
        %347 = vst [vmem:[#allocation2 + $0x18] sm:$0xff] %v339
        %348 = vst [vmem:[#allocation2 + $0x20] sm:$0xff] %v340
        %349 = vst [vmem:[#allocation2 + $0x28] sm:$0xff] %v341
        %350 = vst [vmem:[#allocation2 + $0x30] sm:$0xff] %v342
        %351 = vst [vmem:[#allocation2 + $0x38] sm:$0xff] %v343
        // Predicated region
        $region37: #{channel_attention.1} parent=31 // pred_check
          %p352 = pneg %p196
        $region38: #{channel_attention.1} parent=31 // pred_check_branch
          %354 = sbr.rel (%p352) target = $region40
        $region39: #{channel_attention.1} parent=31 // pred_region
          %v355 = vld [vmem:[#allocation2] sm:$0xff]
          %v356 = vld [vmem:[#allocation2 + $0x8] sm:$0xff]
          %v357 = vld [vmem:[#allocation2 + $0x10] sm:$0xff]
          %v358 = vld [vmem:[#allocation2 + $0x18] sm:$0xff]
          %v359 = vld [vmem:[#allocation2 + $0x20] sm:$0xff]
          %v360 = vld [vmem:[#allocation2 + $0x28] sm:$0xff]
          %v361 = vld [vmem:[#allocation2 + $0x30] sm:$0xff]
          %v362 = vld [vmem:[#allocation2 + $0x38] sm:$0xff]
          %363 = vmax.xlane.f32.xlu0 %v355
          %v364 = vpop.xlane.xlu0 %363
          %365 = vmax.xlane.f32.xlu0 %v356
          %v366 = vpop.xlane.xlu0 %365
          %367 = vmax.xlane.f32.xlu0 %v357
          %v368 = vpop.xlane.xlu0 %367
          %369 = vmax.xlane.f32.xlu0 %v358
          %v370 = vpop.xlane.xlu0 %369
          %371 = vmax.xlane.f32.xlu0 %v359
          %v372 = vpop.xlane.xlu0 %371
          %373 = vmax.xlane.f32.xlu0 %v360
          %v374 = vpop.xlane.xlu0 %373
          %375 = vmax.xlane.f32.xlu0 %v361
          %v376 = vpop.xlane.xlu0 %375
          %377 = vmax.xlane.f32.xlu0 %v362
          %v378 = vpop.xlane.xlu0 %377
          %v379 = vld [vmem:[%s1] sm:$0xff]
          %v380 = vld [vmem:[%s1 + $0x8] sm:$0xff]
          %v381 = vld [vmem:[%s1 + $0x10] sm:$0xff]
          %v382 = vld [vmem:[%s1 + $0x18] sm:$0xff]
          %v383 = vld [vmem:[%s1 + $0x20] sm:$0xff]
          %v384 = vld [vmem:[%s1 + $0x28] sm:$0xff]
          %v385 = vld [vmem:[%s1 + $0x30] sm:$0xff]
          %v386 = vld [vmem:[%s1 + $0x38] sm:$0xff]
          %v395 = vlaneseq
          %v396 = vand.u32 %v395, 127
          %v397 = vlaneseq
          %v398 = vshrl.u32 %v397, 7
          %v399 = vsub.s32 %v396, %v398
          %v400 = vrot.slane %v364, %v399
          %v401 = vadd.s32 %v396, 4294967288
          %v402 = vlaneseq
          %v403 = vshrl.u32 %v402, 7
          %v404 = vsub.s32 %v401, %v403
          %v405 = vrot.slane %v366, %v404
          %vm406 = vcmask 130112
          %v407 = vsel %vm406, %v405, %v400
          %v408 = vadd.s32 %v396, 4294967280
          %v409 = vlaneseq
          %v410 = vshrl.u32 %v409, 7
          %v411 = vsub.s32 %v408, %v410
          %v412 = vrot.slane %v368, %v411
          %vm413 = vcmask 195712
          %v414 = vsel %vm413, %v412, %v407
          %v415 = vadd.s32 %v396, 4294967272
          %v416 = vlaneseq
          %v417 = vshrl.u32 %v416, 7
          %v418 = vsub.s32 %v415, %v417
          %v419 = vrot.slane %v370, %v418
          %vm420 = vcmask 261312
          %v421 = vsel %vm420, %v419, %v414
          %v422 = vadd.s32 %v396, 4294967264
          %v423 = vlaneseq
          %v424 = vshrl.u32 %v423, 7
          %v425 = vsub.s32 %v422, %v424
          %v426 = vrot.slane %v372, %v425
          %vm427 = vcmask 326912
          %v428 = vsel %vm427, %v426, %v421
          %v429 = vadd.s32 %v396, 4294967256
          %v430 = vlaneseq
          %v431 = vshrl.u32 %v430, 7
          %v432 = vsub.s32 %v429, %v431
          %v433 = vrot.slane %v374, %v432
          %vm434 = vcmask 392512
          %v435 = vsel %vm434, %v433, %v428
          %v436 = vadd.s32 %v396, 4294967248
          %v437 = vlaneseq
          %v438 = vshrl.u32 %v437, 7
          %v439 = vsub.s32 %v436, %v438
          %v440 = vrot.slane %v376, %v439
          %vm441 = vcmask 458112
          %v442 = vsel %vm441, %v440, %v435
          %v443 = vadd.s32 %v396, 4294967240
          %v444 = vlaneseq
          %v445 = vshrl.u32 %v444, 7
          %v446 = vsub.s32 %v443, %v445
          %v447 = vrot.slane %v378, %v446
          %vm448 = vcmask 523712
          %v449 = vsel %vm448, %v447, %v442
          %vm450 = vcmask 523264
          %v451 = vsel %vm450, %v449, 0
          %453 = vmatprep.subr.mxu0 0.0
          %454 = vmatpush1.msra.mxu0 %v379
          %455 = vmatprep.subr.mxu0 0.0
          %456 = vmatpush1.msra.mxu0 %v380
          %457 = vmatprep.subr.mxu0 0.0
          %458 = vmatpush1.msra.mxu0 %v381
          %459 = vmatprep.subr.mxu0 0.0
          %460 = vmatpush1.msra.mxu0 %v382
          %461 = vmatprep.subr.mxu0 0.0
          %462 = vmatpush1.msra.mxu0 %v383
          %463 = vmatprep.subr.mxu0 0.0
          %464 = vmatpush1.msra.mxu0 %v384
          %465 = vmatprep.subr.mxu0 0.0
          %466 = vmatpush1.msra.mxu0 %v385
          %467 = vmatprep.subr.mxu0 0.0
          %468 = vmatpush1.msra.mxu0 %v386
          %469 = vmatprep.subr.mxu0 0.0
          %470 = vmatpush1.msra.mxu0 0.0
          %471 = vmatprep.subr.mxu0 0.0
          %472 = vmatpush1.msra.mxu0 0.0
          %473 = vmatprep.subr.mxu0 0.0
          %474 = vmatpush1.msra.mxu0 0.0
          %475 = vmatprep.subr.mxu0 0.0
          %476 = vmatpush1.msra.mxu0 0.0
          %477 = vmatprep.subr.mxu0 0.0
          %478 = vmatpush1.msra.mxu0 0.0
          %479 = vmatprep.subr.mxu0 0.0
          %480 = vmatpush1.msra.mxu0 0.0
          %481 = vmatprep.subr.mxu0 0.0
          %482 = vmatpush1.msra.mxu0 0.0
          %483 = vmatprep.subr.mxu0 0.0
          %484 = vmatpush1.msra.mxu0 0.0
          %485 = vmatprep.subr.mxu0 0.0
          %486 = vmatpush1.msra.mxu0 0.0
          %487 = vmatprep.subr.mxu0 0.0
          %488 = vmatpush1.msra.mxu0 0.0
          %489 = vmatprep.subr.mxu0 0.0
          %490 = vmatpush1.msra.mxu0 0.0
          %491 = vmatprep.subr.mxu0 0.0
          %492 = vmatpush1.msra.mxu0 0.0
          %493 = vmatprep.subr.mxu0 0.0
          %494 = vmatpush1.msra.mxu0 0.0
          %495 = vmatprep.subr.mxu0 0.0
          %496 = vmatpush1.msra.mxu0 0.0
          %497 = vmatprep.subr.mxu0 0.0
          %498 = vmatpush1.msra.mxu0 0.0
          %499 = vmatprep.subr.mxu0 0.0
          %500 = vmatpush1.msra.mxu0 0.0
          %501 = vmatprep.subr.mxu0 0.0
          %502 = vmatpush1.msra.mxu0 0.0
          %503 = vmatprep.subr.mxu0 0.0
          %504 = vmatpush1.msra.mxu0 0.0
          %505 = vmatprep.subr.mxu0 0.0
          %506 = vmatpush1.msra.mxu0 0.0
          %507 = vmatprep.subr.mxu0 0.0
          %508 = vmatpush1.msra.mxu0 0.0
          %509 = vmatprep.subr.mxu0 0.0
          %510 = vmatpush1.msra.mxu0 0.0
          %511 = vmatprep.subr.mxu0 0.0
          %512 = vmatpush1.msra.mxu0 0.0
          %513 = vmatprep.subr.mxu0 0.0
          %514 = vmatpush1.msra.mxu0 0.0
          %515 = vmatprep.subr.mxu0 0.0
          %516 = vmatpush1.msra.mxu0 0.0
          %517 = vmatprep.mubr.f32.mxu0 0.0
          %518 = vmatmul.mubr.f32.gmra.mrb[0].mxu0 %v451
          %v519 = vpop.f32.mrb[0].mxu0
          %v520 = vadd.f32 0.0, %v519
          %v521 = vpop.f32.mrb[0].mxu0
          %522 = vdwg.mxu0
          %v523 = vmax.f32 %v520, 0.0
          %v524 = vld [vmem:[%s2] sm:$0xf]
          %vm525 = vcmask 31744
          %v527 = vsel %vm525, %v523, 0
          %vm529 = vcmask 1043456
          %v531 = vsel %vm529, %v524, 0
          %533 = vmatprep.subr.mxu0 0.0
          %534 = vmatpush1.msra.mxu0 %v531
          %535 = vmatprep.subr.mxu0 0.0
          %536 = vmatpush1.msra.mxu0 0.0
          %537 = vmatprep.subr.mxu0 0.0
          %538 = vmatpush1.msra.mxu0 0.0
          %539 = vmatprep.subr.mxu0 0.0
          %540 = vmatpush1.msra.mxu0 0.0
          %541 = vmatprep.subr.mxu0 0.0
          %542 = vmatpush1.msra.mxu0 0.0
          %543 = vmatprep.subr.mxu0 0.0
          %544 = vmatpush1.msra.mxu0 0.0
          %545 = vmatprep.subr.mxu0 0.0
          %546 = vmatpush1.msra.mxu0 0.0
          %547 = vmatprep.subr.mxu0 0.0
          %548 = vmatpush1.msra.mxu0 0.0
          %549 = vmatprep.subr.mxu0 0.0
          %550 = vmatpush1.msra.mxu0 0.0
          %551 = vmatprep.subr.mxu0 0.0
          %552 = vmatpush1.msra.mxu0 0.0
          %553 = vmatprep.subr.mxu0 0.0
          %554 = vmatpush1.msra.mxu0 0.0
          %555 = vmatprep.subr.mxu0 0.0
          %556 = vmatpush1.msra.mxu0 0.0
          %557 = vmatprep.subr.mxu0 0.0
          %558 = vmatpush1.msra.mxu0 0.0
          %559 = vmatprep.subr.mxu0 0.0
          %560 = vmatpush1.msra.mxu0 0.0
          %561 = vmatprep.subr.mxu0 0.0
          %562 = vmatpush1.msra.mxu0 0.0
          %563 = vmatprep.subr.mxu0 0.0
          %564 = vmatpush1.msra.mxu0 0.0
          %565 = vmatprep.subr.mxu0 0.0
          %566 = vmatpush1.msra.mxu0 0.0
          %567 = vmatprep.subr.mxu0 0.0
          %568 = vmatpush1.msra.mxu0 0.0
          %569 = vmatprep.subr.mxu0 0.0
          %570 = vmatpush1.msra.mxu0 0.0
          %571 = vmatprep.subr.mxu0 0.0
          %572 = vmatpush1.msra.mxu0 0.0
          %573 = vmatprep.subr.mxu0 0.0
          %574 = vmatpush1.msra.mxu0 0.0
          %575 = vmatprep.subr.mxu0 0.0
          %576 = vmatpush1.msra.mxu0 0.0
          %577 = vmatprep.subr.mxu0 0.0
          %578 = vmatpush1.msra.mxu0 0.0
          %579 = vmatprep.subr.mxu0 0.0
          %580 = vmatpush1.msra.mxu0 0.0
          %581 = vmatprep.subr.mxu0 0.0
          %582 = vmatpush1.msra.mxu0 0.0
          %583 = vmatprep.subr.mxu0 0.0
          %584 = vmatpush1.msra.mxu0 0.0
          %585 = vmatprep.subr.mxu0 0.0
          %586 = vmatpush1.msra.mxu0 0.0
          %587 = vmatprep.subr.mxu0 0.0
          %588 = vmatpush1.msra.mxu0 0.0
          %589 = vmatprep.subr.mxu0 0.0
          %590 = vmatpush1.msra.mxu0 0.0
          %591 = vmatprep.subr.mxu0 0.0
          %592 = vmatpush1.msra.mxu0 0.0
          %593 = vmatprep.subr.mxu0 0.0
          %594 = vmatpush1.msra.mxu0 0.0
          %595 = vmatprep.subr.mxu0 0.0
          %596 = vmatpush1.msra.mxu0 0.0
          %597 = vmatprep.mubr.f32.mxu0 0.0
          %598 = vmatmul.mubr.f32.gmra.mrb[0].mxu0 %v527
          %v599 = vpop.f32.mrb[0].mxu0
          %v600 = vadd.f32 0.0, %v599
          %v601 = vpop.f32.mrb[0].mxu0
          %602 = vdwg.mxu0
          %v603 = vxor.u32 %v600, 2147483648
          %v604 = vmul.f32 %v603, 1.442695
          %v605 = vpow.pop %v604
          %v606 = vadd.f32 %v605, 1.0
          %v607 = vrcp.pop %v606
          %v608 = vmul.f32 1.0, %v607
          %vm609 = vcmask 516096
          %610 = vst.msk [vmem:[%s185] sm:$0x1] %vm609, %v608
        $region40: #{channel_attention.1} parent=31 // pred_fallthru
          _
        %s611 = sand.u32 %s107, 1
        %s612 = scalar_lea.sflag [#allocation4], %s611
        %s613 = sand.u32 %s107, 1
        %s614 = scalar_lea.vmem [#allocation3], %s613
        // Predicated region
        $region41: #{channel_attention.1} parent=31 // pred_check
          %p615 = pneg %p117
        $region42: #{channel_attention.1} parent=31 // pred_check_branch
          %617 = sbr.rel (%p615) target = $region44
        $region43: #{channel_attention.1} parent=31 // pred_region
          %s619 = ssub.s32 16, 16
          %620 = vsyncadd %s612, %s619
          %s621 = smul.addr %s21, 16
          %s622 = scalar_lea.hbm %s3, %s621
          %s624 = sshll.u32 %s614, 4
          %s625 = int_to_ptr.vmem [resolvable:$true] %s624
          %627 = dma.vmem_to_hbm [thread:$0]  %s625, 16, %s622, %s612
        $region44: #{channel_attention.1} parent=31 // pred_fallthru
          _
      $region32: #{channel_attention.1} parent=5 // pred_fallthru
        _
      %p628 = scmp.le.s32.totalorder 2, %s12
      // Predicated region
      $region45: #{channel_attention.1} parent=5 // pred_check
        %p629 = pneg %p628
      $region46: #{channel_attention.1} parent=5 // pred_check_branch
        %631 = sbr.rel (%p629) target = $region48
      $region47: #{channel_attention.1} parent=5 // pred_region
        %s632 = ssub.s32 %s12, 2
        // Predicated region
        $region49: #{channel_attention.1} parent=47 // pred_check
          %p633 = pneg %p123
        $region50: #{channel_attention.1} parent=47 // pred_check_branch
          %635 = sbr.rel (%p633) target = $region52
        $region51: #{channel_attention.1} parent=47 // pred_region
          %s636 = sand.u32 %s108, 1
          %s637 = scalar_lea.sflag [#allocation4], %s636
          %s638 = sand.u32 %s108, 1
          %s639 = scalar_lea.vmem [#allocation3], %s638
          %640 = dma.done %s637, 16
        $region52: #{channel_attention.1} parent=47 // pred_fallthru
          _
      $region48: #{channel_attention.1} parent=5 // pred_fallthru
        _
    $region6: #{channel_attention.1} parent=1 // loop_footer
      %s16 = sadd.s32 1, %s12
    $region7: #{channel_attention.1} parent=1 // loop_footer_branch
      %11 = sbr.rel target = $region3
    $region8: #{channel_attention.1} parent=1 // loop_exit
      _
    %641 = vsyncpa [#allocation4], 1
    %s642 = scalar_lea.sflag [#allocation4], 1
    %643 = vsyncpa %s642, 1

</llo_original>
